<compile_context>
chip_gen: v7x
topology: tpu7x:2x2x1
jax: 0.10.0
libtpu: 0.0.40
codegen_flags: <defaults>
</compile_context>

<pallas_src>
import functools

import jax
import jax.numpy as jnp
from jax.experimental import pallas as pl
from jax.experimental.pallas import tpu as pltpu

CHANNELS = 3
LANE = 128
SUBLANE = 8

# Combined (batch-folded) rows per fast-path block: 2048 rows of (3, ., 128)
# f32 == 3 MiB per buffer, 12 MiB with in+out double buffering.
TARGET_ROWS = 2048
# Ragged fallback: block is (3, tile_cols); the sublane dim (3) pads to 8 in
# VMEM, so 65536 lanes == 2 MiB padded per buffer (8 MiB double-buffered).
RAGGED_TILE_COLS = 64 * 1024
# Minimum grid steps so input DMA / compute / writeback pipeline overlaps and
# both of v7x's TensorCores get work.
MIN_GRID_STEPS = 4
VMEM_LIMIT_BYTES = 32 * 1024 * 1024


def _round_up(x, m):
    return ((x + m - 1) // m) * m


def _cdiv(a, b):
    return (a + b - 1) // b


def _conv_grey_kernel_nchw(w_ref, x_ref, o_ref):
    """Fast path. w_ref: (3,3) f32 SMEM.  x_ref/o_ref: (nb, 3, R, 128) VMEM."""
    x0 = x_ref[:, 0, :, :]
    x1 = x_ref[:, 1, :, :]
    x2 = x_ref[:, 2, :, :]
    # One output channel at a time keeps live vregs modest; the kernel is
    # HBM-bound (~0.6 flop/byte) so any residual spill traffic hides under DMA.
    # TODO(synk): if bundle dumps at 2048-row tiles show vld/vst slot pressure,
    # chunk this with a lax.fori_loop over row slices.
    for o in range(CHANNELS):
        o_ref[:, o, :, :] = (
            w_ref[o, 0] * x0 + w_ref[o, 1] * x1 + w_ref[o, 2] * x2
        ).astype(o_ref.dtype)


def _conv_grey_kernel_flat(w_ref, x_ref, o_ref):
    """Ragged fallback. w_ref: (3,3) f32 SMEM.  x_ref/o_ref: (3, tile_cols)."""
    x0 = x_ref[0]
    x1 = x_ref[1]
    x2 = x_ref[2]
    for o in range(CHANNELS):
        o_ref[o] = (
            w_ref[o, 0] * x0 + w_ref[o, 1] * x1 + w_ref[o, 2] * x2
        ).astype(o_ref.dtype)


def _choose_nchw_tiling(n, rows):
    """Pick (nb, tile_rows): blocks ~TARGET_ROWS combined rows, but keep the
    grid at >= MIN_GRID_STEPS steps for pipelining / v7x core sharding."""
    if rows >= TARGET_ROWS:
        nb, tile_rows = 1, TARGET_ROWS
    else:
        # Fold whole images into the block (NCHW stays contiguous over it).
        nb, tile_rows = max(1, min(n, TARGET_ROWS // max(rows, 1))), rows

    def steps(nb_, tr_):
        return _cdiv(n, nb_) * _cdiv(rows, tr_)

    while steps(nb, tile_rows) < MIN_GRID_STEPS:
        if nb > 1:
            nb //= 2
        elif tile_rows >= 2 * SUBLANE:
            smaller = _round_up(max(tile_rows // 2, SUBLANE), SUBLANE)
            if smaller >= tile_rows:
                break
            tile_rows = smaller  # multiple of 8 -> valid block sublane dim
        else:
            break
    return nb, tile_rows


def _mix_channels_nchw(w, x_ncrl, nb, tile_rows):
    """w: (3,3) f32.  x_ncrl: (N, 3, rows, 128).  Returns same shape."""
    n, c, rows, lanes = x_ncrl.shape
    grid = (_cdiv(n, nb), _cdiv(rows, tile_rows))
    block = (nb, c, tile_rows, lanes)
    return pl.pallas_call(
        _conv_grey_kernel_nchw,
        out_shape=jax.ShapeDtypeStruct(x_ncrl.shape, x_ncrl.dtype),
        grid=grid,
        in_specs=[
            # Whole 3x3 weight matrix resident in SMEM (not pipelined).
            pl.BlockSpec(memory_space=pltpu.MemorySpace.SMEM),
            pl.BlockSpec(block, lambda b, r: (b, 0, r, 0)),
        ],
        out_specs=pl.BlockSpec(block, lambda b, r: (b, 0, r, 0)),
        compiler_params=pltpu.CompilerParams(
            dimension_semantics=("parallel", "parallel"),
            vmem_limit_bytes=VMEM_LIMIT_BYTES,
        ),
    )(w, x_ncrl)


def _mix_channels_flat(w, x_ncf, tile_cols):
    """w: (3,3) f32.  x_ncf: (N, 3, HW) with HW not a multiple of 128."""
    n, c, hw = x_ncf.shape
    grid = (n, _cdiv(hw, tile_cols))
    block = (None, c, tile_cols)  # batch dim squeezed in-kernel
    return pl.pallas_call(
        _conv_grey_kernel_flat,
        out_shape=jax.ShapeDtypeStruct(x_ncf.shape, x_ncf.dtype),
        grid=grid,
        in_specs=[
            pl.BlockSpec(memory_space=pltpu.MemorySpace.SMEM),
            pl.BlockSpec(block, lambda i, j: (i, 0, j)),
        ],
        out_specs=pl.BlockSpec(block, lambda i, j: (i, 0, j)),
        compiler_params=pltpu.CompilerParams(
            dimension_semantics=("parallel", "parallel"),
            vmem_limit_bytes=VMEM_LIMIT_BYTES,
        ),
    )(w, x_ncf)


def make_conv_grey_weights(rgb_type: str) -> jnp.ndarray:
    """Deterministic weight init matching ConvGrey.setWeights / convWeights."""
    if rgb_type == "RGB":
        w = [[0.299, 0.587, 0.114],
             [-0.147, -0.289, 0.436],
             [0.615, -0.515, -0.1]]
    elif rgb_type == "BGR":
        w = [[0.114, 0.587, 0.299],
             [0.436, -0.289, -0.147],
             [-0.1, -0.515, 0.615]]
    else:
        raise ValueError(f"unsupported rgb_type: {rgb_type}")
    return jnp.array(w, dtype=jnp.float32)


@functools.partial(jax.jit, static_argnames=("rev",))
def conv_grey_forward(x_nchw, conv_weights, rev=False):
    """Equivalent of ConvGrey.forward.

    x_nchw: (N, 3, H, W); conv_weights: (3, 3).
    rev=False: 1x1 conv with W; rev=True: 1x1 conv with inv(W).
    """
    if rev:
        # 3x3 inverse is cheap glue; kept in plain JAX (fused under this jit).
        w = jnp.linalg.inv(conv_weights.astype(jnp.float32))
    else:
        w = conv_weights.astype(jnp.float32)

    n, c, h, ww = x_nchw.shape
    assert c == CHANNELS
    hw = h * ww

    if hw % LANE == 0:
        # Fast path: lane/sublane-dense (rows, 128) slabs per channel,
        # batch-folded blocks of ~TARGET_ROWS combined rows.
        rows = hw // LANE
        x_view = x_nchw.reshape(n, c, rows, LANE)  # contiguous view
        nb, tile_rows = _choose_nchw_tiling(n, rows)
        out = _mix_channels_nchw(w, x_view, nb, tile_rows)
    else:
        # Ragged fallback: channel axis is the (full) sublane dim of the
        # block; lane dim tiled in multiples of 128 (last block masked).
        x_view = x_nchw.reshape(n, c, hw)  # contiguous view
        if hw <= RAGGED_TILE_COLS:
            tile_cols = hw  # block covers the whole (3, hw) slab per image
        else:
            tile_cols = RAGGED_TILE_COLS
            while (n * _cdiv(hw, tile_cols) < MIN_GRID_STEPS
                   and tile_cols > LANE):
                tile_cols = max(LANE, _round_up(tile_cols // 2, LANE))
        out = _mix_channels_flat(w, x_view, tile_cols)

    return out.reshape(n, c, h, ww)


if __name__ == "__main__":
    key = jax.random.PRNGKey(0)
    x = jax.random.normal(key, (2, 3, 16, 16), dtype=jnp.float32)
    w = make_conv_grey_weights("RGB")

    # Forward (rev=False) and reverse (rev=True, 1x1 conv with inverse).
    y = jax.block_until_ready(conv_grey_forward(x, w, rev=False))
    y_rev = jax.block_until_ready(conv_grey_forward(y, w, rev=True))

    y_ref = jnp.einsum("oi,nihw->nohw", w, x)
    assert jnp.allclose(y, y_ref, atol=1e-5), "forward mismatch"
    assert jnp.allclose(y_rev, x, atol=1e-4), "inverse roundtrip mismatch"

    # Aligned case that exercises batch-fold + row-splitting (min-grid-steps).
    x1 = jax.random.normal(jax.random.PRNGKey(1), (2, 3, 64, 64), jnp.float32)
    y1 = jax.block_until_ready(conv_grey_forward(x1, w, rev=False))
    y1_ref = jnp.einsum("oi,nihw->nohw", w, x1)
    assert jnp.allclose(y1, y1_ref, atol=1e-5), "aligned tiled path mismatch"

    # Small ragged case (HW % 128 != 0, single full (3, hw) block per image).
    x2 = jax.random.normal(jax.random.PRNGKey(2), (1, 3, 5, 7), jnp.float32)
    y2 = jax.block_until_ready(conv_grey_forward(x2, w, rev=False))
    y2_ref = jnp.einsum("oi,nihw->nohw", w, x2)
    assert jnp.allclose(y2, y2_ref, atol=1e-5), "ragged path mismatch"

    # Larger ragged case that exercises multiple-of-128 lane tiles + masking.
    x3 = jax.random.normal(jax.random.PRNGKey(3), (1, 3, 300, 300), jnp.float32)
    y3 = jax.block_until_ready(conv_grey_forward(x3, w, rev=False))
    y3_ref = jnp.einsum("oi,nihw->nohw", w, x3)
    assert jnp.allclose(y3, y3_ref, atol=1e-5), "ragged tiled path mismatch"

    print("KERNEL_OK")
</pallas_src>

<mosaic_0001>
module attributes {stable_mosaic.version = 11 : i64} {
  func.func @_conv_grey_kernel_nchw(%arg0: i32, %arg1: i32, %arg2: memref<3x3xf32, #tpu.memory_space<smem>>, %arg3: memref<1x3x2x128xf32, #tpu.memory_space<vmem>>, %arg4: memref<1x3x2x128xf32, #tpu.memory_space<vmem>>) attributes {dimension_semantics = [#tpu.dimension_semantics<parallel>, #tpu.dimension_semantics<parallel>], iteration_bounds = array<i64: 2, 1>, scalar_prefetch = 0 : i64, scratch_operands = 0 : i64, tpu.core_type = #tpu.core_type<tc>, window_params = [{transform_indices = @transform_0, window_bounds = array<i64: 3, 3>}, {transform_indices = @transform_1, window_bounds = array<i64: 1, 3, 2, 128>}, {transform_indices = @transform_2, window_bounds = array<i64: 1, 3, 2, 128>}]} {
    %c0 = arith.constant 0 : index
    %c0_0 = arith.constant 0 : index
    %c0_1 = arith.constant 0 : index
    %c0_2 = arith.constant 0 : index
    %0 = vector.load %arg3[%c0, %c0_0, %c0_1, %c0_2] : memref<1x3x2x128xf32, #tpu.memory_space<vmem>>, vector<1x1x2x128xf32>
    %1 = vector.shape_cast %0 : vector<1x1x2x128xf32> to vector<1x2x128xf32>
    %c0_3 = arith.constant 0 : index
    %c1 = arith.constant 1 : index
    %c0_4 = arith.constant 0 : index
    %c0_5 = arith.constant 0 : index
    %2 = vector.load %arg3[%c0_3, %c1, %c0_4, %c0_5] : memref<1x3x2x128xf32, #tpu.memory_space<vmem>>, vector<1x1x2x128xf32>
    %3 = vector.shape_cast %2 : vector<1x1x2x128xf32> to vector<1x2x128xf32>
    %c0_6 = arith.constant 0 : index
    %c2 = arith.constant 2 : index
    %c0_7 = arith.constant 0 : index
    %c0_8 = arith.constant 0 : index
    %4 = vector.load %arg3[%c0_6, %c2, %c0_7, %c0_8] : memref<1x3x2x128xf32, #tpu.memory_space<vmem>>, vector<1x1x2x128xf32>
    %5 = vector.shape_cast %4 : vector<1x1x2x128xf32> to vector<1x2x128xf32>
    %c0_9 = arith.constant 0 : index
    %c0_10 = arith.constant 0 : index
    %6 = memref.load %arg2[%c0_9, %c0_10] : memref<3x3xf32, #tpu.memory_space<smem>>
    %7 = vector.broadcast %6 : f32 to vector<1x2x128xf32>
    %8 = arith.mulf %7, %1 : vector<1x2x128xf32>
    %c0_11 = arith.constant 0 : index
    %c1_12 = arith.constant 1 : index
    %9 = memref.load %arg2[%c0_11, %c1_12] : memref<3x3xf32, #tpu.memory_space<smem>>
    %10 = vector.broadcast %9 : f32 to vector<1x2x128xf32>
    %11 = arith.mulf %10, %3 : vector<1x2x128xf32>
    %12 = arith.addf %8, %11 : vector<1x2x128xf32>
    %c0_13 = arith.constant 0 : index
    %c2_14 = arith.constant 2 : index
    %13 = memref.load %arg2[%c0_13, %c2_14] : memref<3x3xf32, #tpu.memory_space<smem>>
    %14 = vector.broadcast %13 : f32 to vector<1x2x128xf32>
    %15 = arith.mulf %14, %5 : vector<1x2x128xf32>
    %16 = arith.addf %12, %15 : vector<1x2x128xf32>
    %c0_15 = arith.constant 0 : index
    %c0_16 = arith.constant 0 : index
    %c0_17 = arith.constant 0 : index
    %c0_18 = arith.constant 0 : index
    %17 = vector.load %arg4[%c0_15, %c0_16, %c0_17, %c0_18] : memref<1x3x2x128xf32, #tpu.memory_space<vmem>>, vector<1x1x2x128xf32>
    %18 = vector.shape_cast %17 : vector<1x1x2x128xf32> to vector<1x2x128xf32>
    %19 = vector.shape_cast %16 : vector<1x2x128xf32> to vector<1x1x2x128xf32>
    tpu.vector_store %arg4[%c0_15, %c0_16, %c0_17, %c0_18], %19 {strides = array<i32>} : memref<1x3x2x128xf32, #tpu.memory_space<vmem>>, vector<1x1x2x128xf32>,
    %c1_19 = arith.constant 1 : index
    %c0_20 = arith.constant 0 : index
    %20 = memref.load %arg2[%c1_19, %c0_20] : memref<3x3xf32, #tpu.memory_space<smem>>
    %21 = vector.broadcast %20 : f32 to vector<1x2x128xf32>
    %22 = arith.mulf %21, %1 : vector<1x2x128xf32>
    %c1_21 = arith.constant 1 : index
    %c1_22 = arith.constant 1 : index
    %23 = memref.load %arg2[%c1_21, %c1_22] : memref<3x3xf32, #tpu.memory_space<smem>>
    %24 = vector.broadcast %23 : f32 to vector<1x2x128xf32>
    %25 = arith.mulf %24, %3 : vector<1x2x128xf32>
    %26 = arith.addf %22, %25 : vector<1x2x128xf32>
    %c1_23 = arith.constant 1 : index
    %c2_24 = arith.constant 2 : index
    %27 = memref.load %arg2[%c1_23, %c2_24] : memref<3x3xf32, #tpu.memory_space<smem>>
    %28 = vector.broadcast %27 : f32 to vector<1x2x128xf32>
    %29 = arith.mulf %28, %5 : vector<1x2x128xf32>
    %30 = arith.addf %26, %29 : vector<1x2x128xf32>
    %c0_25 = arith.constant 0 : index
    %c1_26 = arith.constant 1 : index
    %c0_27 = arith.constant 0 : index
    %c0_28 = arith.constant 0 : index
    %31 = vector.load %arg4[%c0_25, %c1_26, %c0_27, %c0_28] : memref<1x3x2x128xf32, #tpu.memory_space<vmem>>, vector<1x1x2x128xf32>
    %32 = vector.shape_cast %31 : vector<1x1x2x128xf32> to vector<1x2x128xf32>
    %33 = vector.shape_cast %30 : vector<1x2x128xf32> to vector<1x1x2x128xf32>
    tpu.vector_store %arg4[%c0_25, %c1_26, %c0_27, %c0_28], %33 {strides = array<i32>} : memref<1x3x2x128xf32, #tpu.memory_space<vmem>>, vector<1x1x2x128xf32>,
    %c2_29 = arith.constant 2 : index
    %c0_30 = arith.constant 0 : index
    %34 = memref.load %arg2[%c2_29, %c0_30] : memref<3x3xf32, #tpu.memory_space<smem>>
    %35 = vector.broadcast %34 : f32 to vector<1x2x128xf32>
    %36 = arith.mulf %35, %1 : vector<1x2x128xf32>
    %c2_31 = arith.constant 2 : index
    %c1_32 = arith.constant 1 : index
    %37 = memref.load %arg2[%c2_31, %c1_32] : memref<3x3xf32, #tpu.memory_space<smem>>
    %38 = vector.broadcast %37 : f32 to vector<1x2x128xf32>
    %39 = arith.mulf %38, %3 : vector<1x2x128xf32>
    %40 = arith.addf %36, %39 : vector<1x2x128xf32>
    %c2_33 = arith.constant 2 : index
    %c2_34 = arith.constant 2 : index
    %41 = memref.load %arg2[%c2_33, %c2_34] : memref<3x3xf32, #tpu.memory_space<smem>>
    %42 = vector.broadcast %41 : f32 to vector<1x2x128xf32>
    %43 = arith.mulf %42, %5 : vector<1x2x128xf32>
    %44 = arith.addf %40, %43 : vector<1x2x128xf32>
    %c0_35 = arith.constant 0 : index
    %c2_36 = arith.constant 2 : index
    %c0_37 = arith.constant 0 : index
    %c0_38 = arith.constant 0 : index
    %45 = vector.load %arg4[%c0_35, %c2_36, %c0_37, %c0_38] : memref<1x3x2x128xf32, #tpu.memory_space<vmem>>, vector<1x1x2x128xf32>
    %46 = vector.shape_cast %45 : vector<1x1x2x128xf32> to vector<1x2x128xf32>
    %47 = vector.shape_cast %44 : vector<1x2x128xf32> to vector<1x1x2x128xf32>
    tpu.vector_store %arg4[%c0_35, %c2_36, %c0_37, %c0_38], %47 {strides = array<i32>} : memref<1x3x2x128xf32, #tpu.memory_space<vmem>>, vector<1x1x2x128xf32>,
    return
  }
  func.func @transform_0(%arg0: i32, %arg1: i32) -> (i32, i32) {
    %c0_i32 = arith.constant 0 : i32
    %c0_i32_0 = arith.constant 0 : i32
    %c0_i32_1 = arith.constant 0 : i32
    return %c0_i32, %c0_i32_0 : i32, i32
  }
  func.func @transform_1(%arg0: i32, %arg1: i32) -> (i32, i32, i32, i32) {
    %c0_i32 = arith.constant 0 : i32
    %c0_i32_0 = arith.constant 0 : i32
    %c0_i32_1 = arith.constant 0 : i32
    return %arg0, %c0_i32, %arg1, %c0_i32_0 : i32, i32, i32, i32
  }
  func.func @transform_2(%arg0: i32, %arg1: i32) -> (i32, i32, i32, i32) {
    %c0_i32 = arith.constant 0 : i32
    %c0_i32_0 = arith.constant 0 : i32
    %c0_i32_1 = arith.constant 0 : i32
    return %arg0, %c0_i32, %arg1, %c0_i32_0 : i32, i32, i32, i32
  }
}

</mosaic_0001>

<llo_original>
// kernel: conv_grey_forward.1
$region0: #{conv_grey_forward.1}
  #allocation0 [shape = 'u32[]', space=smem, size = 0x4, offset = 0x4, fixed_abs, tag = 'smem constant byte address 0x4 - core index']
  #allocation1 [shape = 'u32[144,128]{1,0:T(1,128)}', space=vmem, size = 0x12000, scoped, tag = 'internal scratch']
  %s0 = inlined_call_operand.vmem [shape: f32[3,3], index: 0, kind: input, shape index: {}]
  %s1 = inlined_call_operand.vmem [shape: f32[2,3,2,128], index: 1, kind: input, shape index: {}]
  %s2 = inlined_call_operand.vmem [shape: f32[2,3,2,128], index: 2, kind: output, shape index: {}]
  %s3 = sld [smem:[#allocation0]]
  $region45: #{conv_grey_forward.1} parent=0
    _
  %s5 = ssub.s32 1, %s3
  %s6 = scalar_select 0, %s5, %s3
  $region1: #{conv_grey_forward.1} parent=0
    #allocation2 [shape = 'u8[2048]{0}', space=smem, size = 0x800, scoped, tag = 'input window, operand 0, single buffered']
    #allocation3 [shape = 's32[2]{0}', space=sflag, size = 0x8, scoped, tag = 'scoped memory for conv_grey_forward.1']
    %7 = vsyncpa [#allocation3], 0
    loop: start=0, step=1, limit=4
    $region2: #{conv_grey_forward.1} parent=1 // loop_pre_header
      _
    $region3: #{conv_grey_forward.1} parent=1 // loop_header
      %s9 = sphi 0, %s13
      %p10 = scmp.ge.s32.totalorder %s9, 4
      %s16 = sphi 0, %s28
      %s17 = sphi 0, %s24
      %s18 = sphi 0, %s16
      %s19 = sphi 0, %s17
      %s20 = sphi 0, %s18
      %s21 = sphi 0, %s19
      %s29 = sphi 0, %s29
      %s31 = sphi 0, %s29
      %s32 = sphi 0, %s31
      %s46 = sphi 0, %s32
      %s54 = sphi 0, %s56
      %s57 = sphi 0, %s54
      %s58 = sphi 0, %s57
      %s74 = sphi 0, %s58
      %s82 = sphi 0, %s84
      %s85 = sphi 0, %s82
      %s86 = sphi 0, %s85
      %s102 = sphi 0, %s86
    $region4: #{conv_grey_forward.1} parent=1 // loop_header_branch
      %12 = sbr.rel (%p10) target = $region8
    $region5: #{conv_grey_forward.1} parent=1 // loop_body
      %s14 = ssub.s32 %s9, 1
      %s15 = ssub.s32 %s9, 2
      %s22 = sadd.s32 1, %s17
      %p23 = scmp.ge.s32.totalorder %s22, 1
      %s24 = scalar_select %p23, 0, %s22
      %s25 = sadd.s32 1, %s16
      %s26 = scalar_select %p23, %s25, %s16
      %p27 = scmp.ge.s32.totalorder %s26, 2
      %s28 = scalar_select %p27, 0, %s26
      %s30 = sadd.s32 %s29, 1
      %p33 = scmp.eq.s32.totalorder %s9, 1
      %p34 = scmp.ne.s32.totalorder %s29, %s31
      %p35 = scmp.eq.s32.totalorder %s9, 0
      %p36 = por %p34, %p35
      %p37 = scmp.ne.s32.totalorder %s29, %s31
      %p38 = scmp.eq.s32.totalorder %s14, 1
      %p39 = por %p37, %p38
      %p40 = scmp.ne.s32.totalorder %s31, %s32
      %p41 = scmp.eq.s32.totalorder %s14, 0
      %p42 = por %p40, %p41
      %p43 = scmp.ne.s32.totalorder %s31, %s32
      %p44 = scmp.eq.s32.totalorder %s15, 1
      %p45 = por %p43, %p44
      %p47 = scmp.ne.s32.totalorder %s32, %s46
      %p48 = scmp.eq.s32.totalorder %s15, 0
      %p49 = por %p47, %p48
      %s50 = ssub.s32 %s16, %s28
      %s51 = ssub.s32 %s17, %s24
      %s52 = sor.u32 %s50, %s51
      %p53 = scmp.eq.s32.totalorder %s52, 0
      %s55 = sadd.s32 %s54, 1
      %s56 = scalar_select %p53, %s54, %s55
      %p59 = pneg %p53
      %p60 = scmp.eq.s32.totalorder %s9, 1
      %p61 = por %p59, %p60
      %p62 = scmp.ne.s32.totalorder %s54, %s57
      %p63 = scmp.eq.s32.totalorder %s9, 0
      %p64 = por %p62, %p63
      %p65 = scmp.ne.s32.totalorder %s54, %s57
      %p66 = scmp.eq.s32.totalorder %s14, 1
      %p67 = por %p65, %p66
      %p68 = scmp.ne.s32.totalorder %s57, %s58
      %p69 = scmp.eq.s32.totalorder %s14, 0
      %p70 = por %p68, %p69
      %p71 = scmp.ne.s32.totalorder %s57, %s58
      %p72 = scmp.eq.s32.totalorder %s15, 1
      %p73 = por %p71, %p72
      %p75 = scmp.ne.s32.totalorder %s58, %s74
      %p76 = scmp.eq.s32.totalorder %s15, 0
      %p77 = por %p75, %p76
      %s78 = ssub.s32 %s16, %s28
      %s79 = ssub.s32 %s17, %s24
      %s80 = sor.u32 %s78, %s79
      %p81 = scmp.eq.s32.totalorder %s80, 0
      %s83 = sadd.s32 %s82, 1
      %s84 = scalar_select %p81, %s82, %s83
      %p87 = pneg %p81
      %p88 = scmp.eq.s32.totalorder %s9, 1
      %p89 = por %p87, %p88
      %p90 = scmp.ne.s32.totalorder %s82, %s85
      %p91 = scmp.eq.s32.totalorder %s9, 0
      %p92 = por %p90, %p91
      %p93 = scmp.ne.s32.totalorder %s82, %s85
      %p94 = scmp.eq.s32.totalorder %s14, 1
      %p95 = por %p93, %p94
      %p96 = scmp.ne.s32.totalorder %s85, %s86
      %p97 = scmp.eq.s32.totalorder %s14, 0
      %p98 = por %p96, %p97
      %p99 = scmp.ne.s32.totalorder %s85, %s86
      %p100 = scmp.eq.s32.totalorder %s15, 1
      %p101 = por %p99, %p100
      %p103 = scmp.ne.s32.totalorder %s86, %s102
      %p104 = scmp.eq.s32.totalorder %s15, 0
      %p105 = por %p103, %p104
      %p106 = scmp.le.s32.totalorder 1, %s9
      %p107 = scmp.lt.s32.totalorder %s9, 3
      %p108 = pnand %p106, %p107
      %p109 = pneg %p108
      // Predicated region
      $region9: #{conv_grey_forward.1} parent=5 // pred_check
        _
      $region10: #{conv_grey_forward.1} parent=5 // pred_check_branch
        %111 = sbr.rel (%p108) target = $region12
      $region11: #{conv_grey_forward.1} parent=5 // pred_region
        %s112 = ssub.s32 %s9, 1
        // Predicated region
        $region13: #{conv_grey_forward.1} parent=11 // pred_check
          %p113 = pneg %p42
        $region14: #{conv_grey_forward.1} parent=11 // pred_check_branch
          %115 = sbr.rel (%p113) target = $region16
        $region15: #{conv_grey_forward.1} parent=11 // pred_region
          %s117 = ssub.s32 64, 64
          %118 = vsyncadd [#allocation3], %s117
          %s120 = sshll.u32 %s0, 4
          %s121 = int_to_ptr.vmem [resolvable:$true] %s120
          %123 = dma.vmem_to_smem %s121, 64, [#allocation2], [#allocation3]
        $region16: #{conv_grey_forward.1} parent=11 // pred_fallthru
          _
      $region12: #{conv_grey_forward.1} parent=5 // pred_fallthru
        _
      %p124 = scmp.lt.s32.totalorder %s9, 2
      // Predicated region
      $region17: #{conv_grey_forward.1} parent=5 // pred_check
        %p125 = pneg %p124
      $region18: #{conv_grey_forward.1} parent=5 // pred_check_branch
        %127 = sbr.rel (%p125) target = $region20
      $region19: #{conv_grey_forward.1} parent=5 // pred_region
        // Predicated region
        $region21: #{conv_grey_forward.1} parent=19 // pred_check
          %p128 = pneg %p64
        $region22: #{conv_grey_forward.1} parent=19 // pred_check_branch
          %130 = sbr.rel (%p128) target = $region24
        $region23: #{conv_grey_forward.1} parent=19 // pred_region
          %p131 = scmp.lt.s32.totalorder %s16, 1
          %s132 = scalar_select %p131, %s16, 1
          %p133 = scmp.lt.s32.totalorder %s17, 0
          %s134 = scalar_select %p133, %s17, 0
          %s135 = smul.addr %s132, 3
          %s136 = sadd.s32 %s134, %s135
          %s137 = smul.addr %s136, 2
          %s138 = scalar_lea.vmem %s1, %s137
        $region24: #{conv_grey_forward.1} parent=19 // pred_fallthru
          _
      $region20: #{conv_grey_forward.1} parent=5 // pred_fallthru
        _
      %p139 = scmp.le.s32.totalorder 1, %s9
      %p140 = scmp.lt.s32.totalorder %s9, 3
      %p141 = pnand %p139, %p140
      %p142 = pneg %p141
      // Predicated region
      $region25: #{conv_grey_forward.1} parent=5 // pred_check
        _
      $region26: #{conv_grey_forward.1} parent=5 // pred_check_branch
        %144 = sbr.rel (%p141) target = $region28
      $region27: #{conv_grey_forward.1} parent=5 // pred_region
        %s145 = ssub.s32 %s9, 1
        // Predicated region
        $region29: #{conv_grey_forward.1} parent=27 // pred_check
          %p146 = pneg %p42
        $region30: #{conv_grey_forward.1} parent=27 // pred_check_branch
          %148 = sbr.rel (%p146) target = $region32
        $region31: #{conv_grey_forward.1} parent=27 // pred_region
          %149 = dma.done [#allocation3], 64
        $region32: #{conv_grey_forward.1} parent=27 // pred_fallthru
          _
        %150 = sfence
        %p151 = pneg %p42
        %p152 = pneg %p39
        %p153 = scmp.lt.s32.totalorder %s18, 1
        %s154 = scalar_select %p153, %s18, 1
        %p155 = scmp.lt.s32.totalorder %s19, 0
        %s156 = scalar_select %p155, %s19, 0
        %s157 = smul.addr %s154, 3
        %s158 = sadd.s32 %s156, %s157
        %s159 = smul.addr %s158, 2
        %s160 = scalar_lea.vmem %s1, %s159
        %p161 = pneg %p70
        %p162 = pneg %p67
        %p163 = pneg %p98
        %p164 = pneg %p95
        %p165 = scmp.lt.s32.totalorder %s18, 1
        %s166 = scalar_select %p165, %s18, 1
        %p167 = scmp.lt.s32.totalorder %s19, 0
        %s168 = scalar_select %p167, %s19, 0
        %s169 = smul.addr %s166, 3
        %s170 = sadd.s32 %s168, %s169
        %s171 = smul.addr %s170, 2
        %s172 = scalar_lea.vmem %s2, %s171
        %p173 = scmp.lt.s32.totalorder %s18, 1
        %s174 = scalar_select %p173, %s18, 1
        %p175 = scmp.lt.s32.totalorder %s19, 0
        %s176 = scalar_select %p175, %s19, 0
        %s177 = smul.addr %s174, 3
        %s178 = sadd.s32 %s176, %s177
        %s179 = smul.addr %s178, 2
        %s180 = scalar_lea.vmem %s1, %s179
        %p181 = scmp.lt.s32.totalorder %s18, 1
        %s182 = scalar_select %p181, %s18, 1
        %p183 = scmp.lt.s32.totalorder %s19, 0
        %s184 = scalar_select %p183, %s19, 0
        %s185 = smul.addr %s182, 3
        %s186 = sadd.s32 %s184, %s185
        %s187 = smul.addr %s186, 2
        %s188 = scalar_lea.vmem %s2, %s187
        %v189 = vld [vmem:[%s180] sm:$0x3]
        %s190 = scalar_lea.vmem %s180, 2
        %v191 = vld [vmem:[%s190] sm:$0x3]
        %s192 = scalar_lea.vmem %s180, 4
        %v193 = vld [vmem:[%s192] sm:$0x3]
        %s194 = sld [smem:[#allocation2]]
        %v195 = vstv %s194
        %v196 = vmul.f32 %v195, %v189
        %s197 = sld [smem:[#allocation2 + $0x1]]
        %v198 = vstv %s197
        %v199 = vmul.f32 %v198, %v191
        %v200 = vadd.f32 %v196, %v199
        %s201 = sld [smem:[#allocation2 + $0x2]]
        %v202 = vstv %s201
        %v203 = vmul.f32 %v202, %v193
        %v204 = vadd.f32 %v200, %v203
        %205 = vst [vmem:[%s188] sm:$0x3] %v204
        %s206 = sld [smem:[#allocation2 + $0x80]]
        %v207 = vstv %s206
        %v208 = vmul.f32 %v207, %v189
        %s209 = sld [smem:[#allocation2 + $0x81]]
        %v210 = vstv %s209
        %v211 = vmul.f32 %v210, %v191
        %v212 = vadd.f32 %v208, %v211
        %s213 = sld [smem:[#allocation2 + $0x82]]
        %v214 = vstv %s213
        %v215 = vmul.f32 %v214, %v193
        %v216 = vadd.f32 %v212, %v215
        %s217 = scalar_lea.vmem %s188, 2
        %218 = vst [vmem:[%s217] sm:$0x3] %v216
        %s219 = sld [smem:[#allocation2 + $0x100]]
        %v220 = vstv %s219
        %v221 = vmul.f32 %v220, %v189
        %s222 = sld [smem:[#allocation2 + $0x101]]
        %v223 = vstv %s222
        %v224 = vmul.f32 %v223, %v191
        %v225 = vadd.f32 %v221, %v224
        %s226 = sld [smem:[#allocation2 + $0x102]]
        %v227 = vstv %s226
        %v228 = vmul.f32 %v227, %v193
        %v229 = vadd.f32 %v225, %v228
        %s230 = scalar_lea.vmem %s188, 4
        %231 = vst [vmem:[%s230] sm:$0x3] %v229
        %p232 = scmp.lt.s32.totalorder %s18, 1
        %s233 = scalar_select %p232, %s18, 1
        %p234 = scmp.lt.s32.totalorder %s19, 0
        %s235 = scalar_select %p234, %s19, 0
        %s236 = smul.addr %s233, 3
        %s237 = sadd.s32 %s235, %s236
        %s238 = smul.addr %s237, 2
        %s239 = scalar_lea.vmem %s2, %s238
        // Predicated region
        $region33: #{conv_grey_forward.1} parent=27 // pred_check
          %p240 = pneg %p95
        $region34: #{conv_grey_forward.1} parent=27 // pred_check_branch
          %242 = sbr.rel (%p240) target = $region36
        $region35: #{conv_grey_forward.1} parent=27 // pred_region
          _
        $region36: #{conv_grey_forward.1} parent=27 // pred_fallthru
          _
      $region28: #{conv_grey_forward.1} parent=5 // pred_fallthru
        _
      %p243 = scmp.le.s32.totalorder 2, %s9
      // Predicated region
      $region37: #{conv_grey_forward.1} parent=5 // pred_check
        %p244 = pneg %p243
      $region38: #{conv_grey_forward.1} parent=5 // pred_check_branch
        %246 = sbr.rel (%p244) target = $region40
      $region39: #{conv_grey_forward.1} parent=5 // pred_region
        %s247 = ssub.s32 %s9, 2
        // Predicated region
        $region41: #{conv_grey_forward.1} parent=39 // pred_check
          %p248 = pneg %p101
        $region42: #{conv_grey_forward.1} parent=39 // pred_check_branch
          %250 = sbr.rel (%p248) target = $region44
        $region43: #{conv_grey_forward.1} parent=39 // pred_region
          %p251 = scmp.lt.s32.totalorder %s20, 1
          %s252 = scalar_select %p251, %s20, 1
          %p253 = scmp.lt.s32.totalorder %s21, 0
          %s254 = scalar_select %p253, %s21, 0
          %s255 = smul.addr %s252, 3
          %s256 = sadd.s32 %s254, %s255
          %s257 = smul.addr %s256, 2
          %s258 = scalar_lea.vmem %s2, %s257
        $region44: #{conv_grey_forward.1} parent=39 // pred_fallthru
          _
      $region40: #{conv_grey_forward.1} parent=5 // pred_fallthru
        _
    $region6: #{conv_grey_forward.1} parent=1 // loop_footer
      %s13 = sadd.s32 1, %s9
    $region7: #{conv_grey_forward.1} parent=1 // loop_footer_branch
      %8 = sbr.rel target = $region3
    $region8: #{conv_grey_forward.1} parent=1 // loop_exit
      _
    %259 = vsyncpa [#allocation3], 1
    %s260 = scalar_lea.sflag [#allocation3], 1
    %261 = vsyncpa %s260, 1

</llo_original>
